<compile_context>
chip_gen: v5e
topology: v5e:2x2
jax: 0.10.0
libtpu: 0.0.40
codegen_flags: <defaults>
</compile_context>

<pallas_src>
import functools

import jax
import jax.numpy as jnp
from jax.experimental import pallas as pl
from jax.experimental.pallas import tpu as pltpu


def _round_up(v, m):
    return ((v + m - 1) // m) * m


# ----------------------------- Pallas kernel --------------------------------

def _sage_fused_kernel(*refs, num_layers, out_channels, c_pad, k_pads):
    """Fused forward for the whole SAGE network.

    refs layout (positional):
      refs[0]            adj     bf16 [Np, Np]        0/1 edge-count matrix (padded)
      refs[1]            inv_deg f32  [Np, 1]         1 / in-degree (mean normalizer)
      refs[2]            x       f32  [Np, Cp]        input features (channel-padded)
      refs[3 + 3*l + 0]  wcat    bf16 [Kl, 2*Cp]      concat(Wl, Wr), Kl = rup(c_in,16)
      refs[3 + 3*l + 1]  scale   f32  [1, Cp]         folded eval-BN scale (1 for last)
      refs[3 + 3*l + 2]  shift   f32  [1, Cp]         folded eval-BN shift (+ lin_l bias)
      refs[-1]           out     f32  [Np, Cp]        log-softmax output (lane-dense)
    """
    adj_ref = refs[0]
    invdeg_ref = refs[1]
    x_ref = refs[2]
    out_ref = refs[-1]
    layer_refs = refs[3:-1]

    adj = adj_ref[...]               # bf16 0/1 counts, MXU input
    inv_deg = invdeg_ref[...]        # f32 [Np, 1]
    x = x_ref[...]                   # f32 activations, carried at Cp lanes

    for l in range(num_layers):
        wcat = layer_refs[3 * l][...]          # bf16 [Kl, 2*Cp]
        scale = layer_refs[3 * l + 1][...]     # f32  [1, Cp]
        shift = layer_refs[3 * l + 2][...]     # f32  [1, Cp]
        k = k_pads[l]

        # Z = X[:, :Kl] @ [Wl | Wr]  (one MXU call), reassociated A @ (X @ Wl).
        xk = x[:, :k].astype(jnp.bfloat16)     # offset-0 lane slice, no relayout
        z = jnp.dot(xk, wcat, preferred_element_type=jnp.float32)
        zl = z[:, :c_pad]
        zr = z[:, c_pad:]
        agg = jnp.dot(adj, zl.astype(jnp.bfloat16),
                      preferred_element_type=jnp.float32)
        # f32 mean normalization + fused eval-BN epilogue (bias folded in).
        h = (agg * inv_deg + zr) * scale + shift

        if l < num_layers - 1:
            x = jnp.maximum(h, 0.0)            # ReLU (dropout = identity, eval)
        else:
            # Fused log_softmax over the first `out_channels` lanes only;
            # padded lanes are written as 0 (no -inf garbage in the output).
            lane = jax.lax.broadcasted_iota(jnp.int32, h.shape, dimension=1)
            valid = lane < out_channels
            hm = jnp.where(valid, h, -1e30)
            m = jnp.max(hm, axis=-1, keepdims=True)
            s = hm - m
            e = jnp.where(valid, jnp.exp(s), 0.0)
            lse = jnp.log(jnp.sum(e, axis=-1, keepdims=True))
            out_ref[...] = jnp.where(valid, s - lse, 0.0).astype(out_ref.dtype)


# ----------------------------- wrapper ---------------------------------------

_VMEM_SPEC = pl.BlockSpec(memory_space=pltpu.MemorySpace.VMEM)


def sage_forward(kparams, x_pad, adj_pad, inv_deg_pad, *, out_channels):
    """Single pallas_call running the full SAGE forward pass."""
    num_layers = len(kparams)
    n_pad, c_pad = x_pad.shape
    k_pads = tuple(int(p["wcat"].shape[0]) for p in kparams)

    inputs = [adj_pad, inv_deg_pad, x_pad]
    for p in kparams:
        inputs.extend([p["wcat"], p["scale"], p["shift"]])

    kernel = functools.partial(
        _sage_fused_kernel,
        num_layers=num_layers,
        out_channels=out_channels,
        c_pad=c_pad,
        k_pads=k_pads,
    )
    return pl.pallas_call(
        kernel,
        out_shape=jax.ShapeDtypeStruct((n_pad, c_pad), jnp.float32),
        in_specs=[_VMEM_SPEC] * len(inputs),
        out_specs=_VMEM_SPEC,
    )(*inputs)


# ----------------------------- parameters ------------------------------------

def init_sage_params(key, in_channels, hidden_channels, out_channels,
                     num_layers, batchnorm=True):
    """Raw (PyTorch-layout-equivalent) parameters, stored transposed [Cin, Cout]."""
    dims = [in_channels] + [hidden_channels] * (num_layers - 1) + [out_channels]
    params = []
    for layer in range(num_layers):
        c_in, c_out = dims[layer], dims[layer + 1]
        key, k1, k2, k3, k4, k5, k6 = jax.random.split(key, 7)
        p = dict(
            wl=0.1 * jax.random.normal(k1, (c_in, c_out), dtype=jnp.float32),
            wr=0.1 * jax.random.normal(k2, (c_in, c_out), dtype=jnp.float32),
            b=0.01 * jax.random.normal(k3, (c_out,), dtype=jnp.float32),
        )
        if batchnorm and layer < num_layers - 1:
            p.update(
                gamma=1.0 + 0.1 * jax.random.normal(k4, (c_out,), jnp.float32),
                beta=0.01 * jax.random.normal(k5, (c_out,), jnp.float32),
                mean=0.05 * jax.random.normal(k6, (c_out,), jnp.float32),
                var=jnp.ones((c_out,), jnp.float32),
            )
        params.append(p)
    return params


def prepare_kernel_params(raw_params, c_pad, bn_eps=1e-5):
    """Fold lin_l bias into the eval-BN shift, pad channels, cast weights to bf16.

    Weight contraction dim is only padded to the bf16 sublane tile (16), not to
    c_pad, cutting the weight DMA bytes ~5x (they are mostly zeros otherwise).
    """
    kparams = []
    num_layers = len(raw_params)
    for i, p in enumerate(raw_params):
        c_in, c_out = p["wl"].shape
        k_pad = _round_up(c_in, 16)                       # bf16 sublane tile
        wl_p = jnp.zeros((k_pad, c_pad), jnp.float32).at[:c_in, :c_out].set(p["wl"])
        wr_p = jnp.zeros((k_pad, c_pad), jnp.float32).at[:c_in, :c_out].set(p["wr"])
        wcat = jnp.concatenate([wl_p, wr_p], axis=1).astype(jnp.bfloat16)

        if "gamma" in p and i < num_layers - 1:
            s = p["gamma"] / jnp.sqrt(p["var"] + bn_eps)
            sh = p["beta"] - p["mean"] * s + p["b"] * s   # bias folded into BN shift
        else:
            s = jnp.ones((c_out,), jnp.float32)
            sh = p["b"]                                   # last layer: shift = bias

        scale = jnp.zeros((1, c_pad), jnp.float32).at[0, :c_out].set(s)
        shift = jnp.zeros((1, c_pad), jnp.float32).at[0, :c_out].set(sh)
        kparams.append(dict(wcat=wcat, scale=scale, shift=shift))
    return kparams


def build_adjacency(edge_index, num_nodes):
    """Dense 0/1 edge-count matrix A[i, j] = #edges j -> i, plus f32 1/in_deg."""
    src = edge_index[0]
    dst = edge_index[1]
    adj = jnp.zeros((num_nodes, num_nodes), dtype=jnp.float32)
    adj = adj.at[dst, src].add(1.0)
    deg = jnp.sum(adj, axis=1, keepdims=True)
    inv_deg = 1.0 / jnp.maximum(deg, 1.0)
    return adj, inv_deg


# ----------------------------- pure-JAX reference ----------------------------

def sage_reference(raw_params, x, adj_counts, inv_deg, bn_eps=1e-5):
    """Eval-mode reference matching the PyTorch module (f32 throughout)."""
    h = x
    num_layers = len(raw_params)
    for i, p in enumerate(raw_params):
        agg = (adj_counts @ h) * inv_deg                  # mean aggregation
        out = agg @ p["wl"] + p["b"] + h @ p["wr"]
        if i < num_layers - 1:
            if "gamma" in p:
                scale = p["gamma"] / jnp.sqrt(p["var"] + bn_eps)
                out = (out - p["mean"]) * scale + p["beta"]
            out = jnp.maximum(out, 0.0)
        h = out
    return jax.nn.log_softmax(h, axis=-1)


# ----------------------------- main ------------------------------------------

if __name__ == "__main__":
    key = jax.random.PRNGKey(0)

    # Small graph: 16 nodes, 48 directed edges, in=16, hidden=32, out=8, 3 layers.
    num_nodes = 16
    num_edges = 48
    in_channels = 16
    hidden_channels = 32
    out_channels = 8
    num_layers = 3

    C_PAD = 128                              # lane-dense channel padding
    n_pad = _round_up(num_nodes, 16)         # bf16 sublane-tile-aligned node count

    key, kx, ke, kp = jax.random.split(key, 4)
    x = jax.random.normal(kx, (num_nodes, in_channels), dtype=jnp.float32)
    edge_index = jax.random.randint(ke, (2, num_edges), 0, num_nodes,
                                    dtype=jnp.int32)

    adj, inv_deg = build_adjacency(edge_index, num_nodes)
    raw_params = init_sage_params(kp, in_channels, hidden_channels,
                                  out_channels, num_layers, batchnorm=True)
    kparams = prepare_kernel_params(raw_params, C_PAD)

    # Padded (lane/sublane-aligned) inputs for the kernel.
    adj_pad = (jnp.zeros((n_pad, n_pad), jnp.float32)
               .at[:num_nodes, :num_nodes].set(adj).astype(jnp.bfloat16))
    inv_deg_pad = (jnp.ones((n_pad, 1), jnp.float32)
                   .at[:num_nodes, :].set(inv_deg))
    x_pad = (jnp.zeros((n_pad, C_PAD), jnp.float32)
             .at[:num_nodes, :in_channels].set(x))

    out_pad = sage_forward(kparams, x_pad, adj_pad, inv_deg_pad,
                           out_channels=out_channels)
    out_pad = jax.block_until_ready(out_pad)
    out = out_pad[:num_nodes, :out_channels]

    assert out.shape == (num_nodes, out_channels)
    # log_softmax rows should sum (in prob space) to ~1.
    row_sums = jnp.sum(jnp.exp(out), axis=-1)
    assert bool(jnp.all(jnp.abs(row_sums - 1.0) < 1e-4))

    # Compare against the f32 pure-JAX reference.  Remaining error is only the
    # bf16 weight / MXU-input quantization (1/deg is now applied in f32), so the
    # tolerance is tightened vs the previous 1e-1.
    ref = sage_reference(raw_params, x, adj, inv_deg)
    max_err = float(jnp.max(jnp.abs(out - ref)))
    assert max_err < 5e-2, f"max abs err vs reference: {max_err}"

    print("KERNEL_OK")
</pallas_src>

<mosaic_0001>
module attributes {stable_mosaic.version = 11 : i64} {
  func.func @_sage_fused_kernel(%arg0: memref<16x16xbf16, #tpu.memory_space<vmem>>, %arg1: memref<16x1xf32, #tpu.memory_space<vmem>>, %arg2: memref<16x128xf32, #tpu.memory_space<vmem>>, %arg3: memref<16x256xbf16, #tpu.memory_space<vmem>>, %arg4: memref<1x128xf32, #tpu.memory_space<vmem>>, %arg5: memref<1x128xf32, #tpu.memory_space<vmem>>, %arg6: memref<32x256xbf16, #tpu.memory_space<vmem>>, %arg7: memref<1x128xf32, #tpu.memory_space<vmem>>, %arg8: memref<1x128xf32, #tpu.memory_space<vmem>>, %arg9: memref<32x256xbf16, #tpu.memory_space<vmem>>, %arg10: memref<1x128xf32, #tpu.memory_space<vmem>>, %arg11: memref<1x128xf32, #tpu.memory_space<vmem>>, %arg12: memref<16x128xf32, #tpu.memory_space<vmem>>) attributes {dimension_semantics = [], scalar_prefetch = 0 : i64, scratch_operands = 0 : i64, tpu.core_type = #tpu.core_type<tc>} {
    %c0 = arith.constant 0 : index
    %c0_0 = arith.constant 0 : index
    %0 = vector.load %arg0[%c0, %c0_0] : memref<16x16xbf16, #tpu.memory_space<vmem>>, vector<16x16xbf16>
    %c0_1 = arith.constant 0 : index
    %c0_2 = arith.constant 0 : index
    %1 = vector.load %arg1[%c0_1, %c0_2] : memref<16x1xf32, #tpu.memory_space<vmem>>, vector<16x1xf32>
    %c0_3 = arith.constant 0 : index
    %c0_4 = arith.constant 0 : index
    %2 = vector.load %arg2[%c0_3, %c0_4] : memref<16x128xf32, #tpu.memory_space<vmem>>, vector<16x128xf32>
    %c0_5 = arith.constant 0 : index
    %c0_6 = arith.constant 0 : index
    %3 = vector.load %arg3[%c0_5, %c0_6] : memref<16x256xbf16, #tpu.memory_space<vmem>>, vector<16x256xbf16>
    %c0_7 = arith.constant 0 : index
    %c0_8 = arith.constant 0 : index
    %4 = vector.load %arg4[%c0_7, %c0_8] : memref<1x128xf32, #tpu.memory_space<vmem>>, vector<1x128xf32>
    %c0_9 = arith.constant 0 : index
    %c0_10 = arith.constant 0 : index
    %5 = vector.load %arg5[%c0_9, %c0_10] : memref<1x128xf32, #tpu.memory_space<vmem>>, vector<1x128xf32>
    %6 = vector.extract_strided_slice %2 {offsets = [0, 0], sizes = [16, 16], strides = [1, 1]} : vector<16x128xf32> to vector<16x16xf32>
    %7 = arith.truncf %6 : vector<16x16xf32> to vector<16x16xbf16>
    %cst = arith.constant dense<0.000000e+00> : vector<16x256xf32>
    %8 = tpu.matmul %7, %3, %cst {dimension_numbers = #tpu.dot_dimension_numbers<[1], [0], [0], [1], [0, 0, 1, 1], [], []>} : vector<16x16xbf16>, vector<16x256xbf16>, vector<16x256xf32> -> vector<16x256xf32>
    %9 = vector.extract_strided_slice %8 {offsets = [0, 0], sizes = [16, 128], strides = [1, 1]} : vector<16x256xf32> to vector<16x128xf32>
    %10 = vector.extract_strided_slice %8 {offsets = [0, 128], sizes = [16, 128], strides = [1, 1]} : vector<16x256xf32> to vector<16x128xf32>
    %11 = arith.truncf %9 : vector<16x128xf32> to vector<16x128xbf16>
    %cst_11 = arith.constant dense<0.000000e+00> : vector<16x128xf32>
    %12 = tpu.matmul %0, %11, %cst_11 {dimension_numbers = #tpu.dot_dimension_numbers<[1], [0], [0], [1], [0, 0, 1, 1], [], []>} : vector<16x16xbf16>, vector<16x128xbf16>, vector<16x128xf32> -> vector<16x128xf32>
    %13 = vector.broadcast %1 : vector<16x1xf32> to vector<16x128xf32>
    %14 = arith.mulf %12, %13 : vector<16x128xf32>
    %15 = arith.addf %14, %10 : vector<16x128xf32>
    %16 = vector.broadcast %4 : vector<1x128xf32> to vector<16x128xf32>
    %17 = arith.mulf %15, %16 : vector<16x128xf32>
    %18 = vector.broadcast %5 : vector<1x128xf32> to vector<16x128xf32>
    %19 = arith.addf %17, %18 : vector<16x128xf32>
    %cst_12 = arith.constant 0.000000e+00 : f32
    %20 = vector.broadcast %cst_12 : f32 to vector<16x128xf32>
    %21 = arith.maximumf %19, %20 : vector<16x128xf32>
    %c0_13 = arith.constant 0 : index
    %c0_14 = arith.constant 0 : index
    %22 = vector.load %arg6[%c0_13, %c0_14] : memref<32x256xbf16, #tpu.memory_space<vmem>>, vector<32x256xbf16>
    %c0_15 = arith.constant 0 : index
    %c0_16 = arith.constant 0 : index
    %23 = vector.load %arg7[%c0_15, %c0_16] : memref<1x128xf32, #tpu.memory_space<vmem>>, vector<1x128xf32>
    %c0_17 = arith.constant 0 : index
    %c0_18 = arith.constant 0 : index
    %24 = vector.load %arg8[%c0_17, %c0_18] : memref<1x128xf32, #tpu.memory_space<vmem>>, vector<1x128xf32>
    %25 = vector.extract_strided_slice %21 {offsets = [0, 0], sizes = [16, 32], strides = [1, 1]} : vector<16x128xf32> to vector<16x32xf32>
    %26 = arith.truncf %25 : vector<16x32xf32> to vector<16x32xbf16>
    %cst_19 = arith.constant dense<0.000000e+00> : vector<16x256xf32>
    %27 = tpu.matmul %26, %22, %cst_19 {dimension_numbers = #tpu.dot_dimension_numbers<[1], [0], [0], [1], [0, 0, 1, 1], [], []>} : vector<16x32xbf16>, vector<32x256xbf16>, vector<16x256xf32> -> vector<16x256xf32>
    %28 = vector.extract_strided_slice %27 {offsets = [0, 0], sizes = [16, 128], strides = [1, 1]} : vector<16x256xf32> to vector<16x128xf32>
    %29 = vector.extract_strided_slice %27 {offsets = [0, 128], sizes = [16, 128], strides = [1, 1]} : vector<16x256xf32> to vector<16x128xf32>
    %30 = arith.truncf %28 : vector<16x128xf32> to vector<16x128xbf16>
    %cst_20 = arith.constant dense<0.000000e+00> : vector<16x128xf32>
    %31 = tpu.matmul %0, %30, %cst_20 {dimension_numbers = #tpu.dot_dimension_numbers<[1], [0], [0], [1], [0, 0, 1, 1], [], []>} : vector<16x16xbf16>, vector<16x128xbf16>, vector<16x128xf32> -> vector<16x128xf32>
    %32 = vector.broadcast %1 : vector<16x1xf32> to vector<16x128xf32>
    %33 = arith.mulf %31, %32 : vector<16x128xf32>
    %34 = arith.addf %33, %29 : vector<16x128xf32>
    %35 = vector.broadcast %23 : vector<1x128xf32> to vector<16x128xf32>
    %36 = arith.mulf %34, %35 : vector<16x128xf32>
    %37 = vector.broadcast %24 : vector<1x128xf32> to vector<16x128xf32>
    %38 = arith.addf %36, %37 : vector<16x128xf32>
    %cst_21 = arith.constant 0.000000e+00 : f32
    %39 = vector.broadcast %cst_21 : f32 to vector<16x128xf32>
    %40 = arith.maximumf %38, %39 : vector<16x128xf32>
    %c0_22 = arith.constant 0 : index
    %c0_23 = arith.constant 0 : index
    %41 = vector.load %arg9[%c0_22, %c0_23] : memref<32x256xbf16, #tpu.memory_space<vmem>>, vector<32x256xbf16>
    %c0_24 = arith.constant 0 : index
    %c0_25 = arith.constant 0 : index
    %42 = vector.load %arg10[%c0_24, %c0_25] : memref<1x128xf32, #tpu.memory_space<vmem>>, vector<1x128xf32>
    %c0_26 = arith.constant 0 : index
    %c0_27 = arith.constant 0 : index
    %43 = vector.load %arg11[%c0_26, %c0_27] : memref<1x128xf32, #tpu.memory_space<vmem>>, vector<1x128xf32>
    %44 = vector.extract_strided_slice %40 {offsets = [0, 0], sizes = [16, 32], strides = [1, 1]} : vector<16x128xf32> to vector<16x32xf32>
    %45 = arith.truncf %44 : vector<16x32xf32> to vector<16x32xbf16>
    %cst_28 = arith.constant dense<0.000000e+00> : vector<16x256xf32>
    %46 = tpu.matmul %45, %41, %cst_28 {dimension_numbers = #tpu.dot_dimension_numbers<[1], [0], [0], [1], [0, 0, 1, 1], [], []>} : vector<16x32xbf16>, vector<32x256xbf16>, vector<16x256xf32> -> vector<16x256xf32>
    %47 = vector.extract_strided_slice %46 {offsets = [0, 0], sizes = [16, 128], strides = [1, 1]} : vector<16x256xf32> to vector<16x128xf32>
    %48 = vector.extract_strided_slice %46 {offsets = [0, 128], sizes = [16, 128], strides = [1, 1]} : vector<16x256xf32> to vector<16x128xf32>
    %49 = arith.truncf %47 : vector<16x128xf32> to vector<16x128xbf16>
    %cst_29 = arith.constant dense<0.000000e+00> : vector<16x128xf32>
    %50 = tpu.matmul %0, %49, %cst_29 {dimension_numbers = #tpu.dot_dimension_numbers<[1], [0], [0], [1], [0, 0, 1, 1], [], []>} : vector<16x16xbf16>, vector<16x128xbf16>, vector<16x128xf32> -> vector<16x128xf32>
    %51 = vector.broadcast %1 : vector<16x1xf32> to vector<16x128xf32>
    %52 = arith.mulf %50, %51 : vector<16x128xf32>
    %53 = arith.addf %52, %48 : vector<16x128xf32>
    %54 = vector.broadcast %42 : vector<1x128xf32> to vector<16x128xf32>
    %55 = arith.mulf %53, %54 : vector<16x128xf32>
    %56 = vector.broadcast %43 : vector<1x128xf32> to vector<16x128xf32>
    %57 = arith.addf %55, %56 : vector<16x128xf32>
    %58 = tpu.iota {dimensions = array<i32: 1>} : vector<16x128xi32>
    %c8_i32 = arith.constant 8 : i32
    %59 = vector.broadcast %c8_i32 : i32 to vector<16x128xi32>
    %60 = arith.cmpi slt, %58, %59 : vector<16x128xi32>
    %cst_30 = arith.constant -1.000000e+30 : f32
    %61 = vector.broadcast %cst_30 : f32 to vector<16x128xf32>
    %62 = arith.select %60, %57, %61 : vector<16x128xi1>, vector<16x128xf32>
    %cst_31 = arith.constant dense<0xFF800000> : vector<16xf32>
    %63 = vector.multi_reduction <maximumf>, %62, %cst_31 [1] : vector<16x128xf32> to vector<16xf32>
    %64 = vector.shape_cast %63 : vector<16xf32> to vector<16x1xf32>
    %65 = vector.broadcast %64 : vector<16x1xf32> to vector<16x128xf32>
    %66 = arith.subf %62, %65 : vector<16x128xf32>
    %67 = math.exp %66 : vector<16x128xf32>
    %cst_32 = arith.constant 0.000000e+00 : f32
    %68 = vector.broadcast %cst_32 : f32 to vector<16x128xf32>
    %69 = arith.select %60, %67, %68 : vector<16x128xi1>, vector<16x128xf32>
    %cst_33 = arith.constant dense<0.000000e+00> : vector<16xf32>
    %70 = vector.multi_reduction <add>, %69, %cst_33 [1] : vector<16x128xf32> to vector<16xf32>
    %71 = vector.shape_cast %70 : vector<16xf32> to vector<16x1xf32>
    %72 = math.log %71 : vector<16x1xf32>
    %73 = vector.broadcast %72 : vector<16x1xf32> to vector<16x128xf32>
    %74 = arith.subf %66, %73 : vector<16x128xf32>
    %cst_34 = arith.constant 0.000000e+00 : f32
    %75 = vector.broadcast %cst_34 : f32 to vector<16x128xf32>
    %76 = arith.select %60, %74, %75 : vector<16x128xi1>, vector<16x128xf32>
    %c0_35 = arith.constant 0 : index
    %c0_36 = arith.constant 0 : index
    %77 = vector.load %arg12[%c0_35, %c0_36] : memref<16x128xf32, #tpu.memory_space<vmem>>, vector<16x128xf32>
    tpu.vector_store %arg12[%c0_35, %c0_36], %76 {strides = array<i32>} : memref<16x128xf32, #tpu.memory_space<vmem>>, vector<16x128xf32>,
    return
  }
}

</mosaic_0001>

<llo_original>
// kernel: tpu_custom_call.1
$region0: #{tpu_custom_call.1}
  #allocation0 [shape = 'u32[]', space=smem, size = 0x4, offset = 0x4, fixed_abs, tag = 'smem constant byte address 0x4 - core index']
  #allocation1 [shape = 'u32[72,128]{1,0:T(1,128)}', space=vmem, size = 0x9000, scoped, tag = 'internal scratch']
  %s0 = inlined_call_operand.hbm [shape: bf16[16,16], index: 0, kind: input, shape index: {}]
  %s1 = inlined_call_operand.vmem [shape: f32[16,1], index: 1, kind: input, shape index: {}]
  %s2 = inlined_call_operand.vmem [shape: f32[16,128], index: 2, kind: input, shape index: {}]
  %s3 = inlined_call_operand.hbm [shape: bf16[16,256], index: 3, kind: input, shape index: {}]
  %s4 = inlined_call_operand.vmem [shape: f32[1,128], index: 4, kind: input, shape index: {}]
  %s5 = inlined_call_operand.vmem [shape: f32[1,128], index: 5, kind: input, shape index: {}]
  %s6 = inlined_call_operand.hbm [shape: bf16[32,256], index: 6, kind: input, shape index: {}]
  %s7 = inlined_call_operand.vmem [shape: f32[1,128], index: 7, kind: input, shape index: {}]
  %s8 = inlined_call_operand.vmem [shape: f32[1,128], index: 8, kind: input, shape index: {}]
  %s9 = inlined_call_operand.hbm [shape: bf16[32,256], index: 9, kind: input, shape index: {}]
  %s10 = inlined_call_operand.vmem [shape: f32[1,128], index: 10, kind: input, shape index: {}]
  %s11 = inlined_call_operand.vmem [shape: f32[1,128], index: 11, kind: input, shape index: {}]
  %s12 = inlined_call_operand.hbm [shape: f32[16,128], index: 12, kind: output, shape index: {}]
  %s13 = sld [smem:[#allocation0]]
  $region74: #{tpu_custom_call.1} parent=0
    _
  %s15 = ssub.s32 1, %s13
  %s16 = scalar_select 0, %s15, %s13
  $region1: #{tpu_custom_call.1} parent=0
    #allocation2 [shape = 'u8[4096]{0}', space=vmem, size = 0x1000, scoped, tag = 'input window, operand 0, single buffered']
    #allocation3 [shape = 's32[1]{0}', space=sflag, size = 0x4, scoped, tag = 'scoped memory for tpu_custom_call.1']
    #allocation4 [shape = 's32[1]{0}', space=sflag, size = 0x4, scoped, tag = 'scoped memory for tpu_custom_call.1']
    #allocation5 [shape = 'u8[8192]{0}', space=vmem, size = 0x2000, scoped, tag = 'input window, operand 3, single buffered']
    #allocation6 [shape = 's32[1]{0}', space=sflag, size = 0x4, scoped, tag = 'scoped memory for tpu_custom_call.1']
    #allocation7 [shape = 'u8[16384]{0}', space=vmem, size = 0x4000, scoped, tag = 'input window, operand 6, single buffered']
    #allocation8 [shape = 'u8[16384]{0}', space=vmem, size = 0x4000, scoped, tag = 'input window, operand 9, single buffered']
    #allocation9 [shape = 's32[1]{0}', space=sflag, size = 0x4, scoped, tag = 'scoped memory for tpu_custom_call.1']
    #allocation10 [shape = 'u8[8192]{0}', space=vmem, size = 0x2000, scoped, tag = 'output window, operand 0, single buffered']
    %17 = vsyncpa [#allocation3], 0
    %18 = vsyncpa [#allocation6], 0
    %19 = vsyncpa [#allocation9], 0
    %20 = vsyncpa [#allocation4], 0
    // Predicated region
    $region2: #{tpu_custom_call.1} parent=1 // pred_check
      _
    $region3: #{tpu_custom_call.1} parent=1 // pred_check_branch
      %22 = sbr.rel (0) target = $region5
    $region4: #{tpu_custom_call.1} parent=1 // pred_region
      %24 = vsyncadd [#allocation3], 0
      %s25 = sshll.u32 %s0, 4
      %s26 = int_to_ptr.hbm [resolvable:$true] %s25
      %s27 = sshll.u32 [#allocation2], 4
      %s28 = int_to_ptr.vmem [resolvable:$true] %s27
      %33 = dma.hbm_to_vmem [thread:$0]  %s26, 128, %s28, [#allocation3], 64, 64, 4
    $region5: #{tpu_custom_call.1} parent=1 // pred_fallthru
      _
    // Predicated region
    $region6: #{tpu_custom_call.1} parent=1 // pred_check
      _
    $region7: #{tpu_custom_call.1} parent=1 // pred_check_branch
      %35 = sbr.rel (0) target = $region9
    $region8: #{tpu_custom_call.1} parent=1 // pred_region
      _
    $region9: #{tpu_custom_call.1} parent=1 // pred_fallthru
      _
    // Predicated region
    $region10: #{tpu_custom_call.1} parent=1 // pred_check
      _
    $region11: #{tpu_custom_call.1} parent=1 // pred_check_branch
      %37 = sbr.rel (0) target = $region13
    $region12: #{tpu_custom_call.1} parent=1 // pred_region
      _
    $region13: #{tpu_custom_call.1} parent=1 // pred_fallthru
      _
    // Predicated region
    $region14: #{tpu_custom_call.1} parent=1 // pred_check
      _
    $region15: #{tpu_custom_call.1} parent=1 // pred_check_branch
      %39 = sbr.rel (0) target = $region17
    $region16: #{tpu_custom_call.1} parent=1 // pred_region
      %41 = vsyncadd [#allocation6], 0
      %s42 = sshll.u32 %s3, 4
      %s43 = int_to_ptr.hbm [resolvable:$true] %s42
      %s44 = sshll.u32 [#allocation5], 4
      %s45 = int_to_ptr.vmem [resolvable:$true] %s44
      %50 = dma.hbm_to_vmem [thread:$0]  %s43, 256, %s45, [#allocation6], 128, 128, 8
    $region17: #{tpu_custom_call.1} parent=1 // pred_fallthru
      _
    // Predicated region
    $region18: #{tpu_custom_call.1} parent=1 // pred_check
      _
    $region19: #{tpu_custom_call.1} parent=1 // pred_check_branch
      %52 = sbr.rel (0) target = $region21
    $region20: #{tpu_custom_call.1} parent=1 // pred_region
      _
    $region21: #{tpu_custom_call.1} parent=1 // pred_fallthru
      _
    // Predicated region
    $region22: #{tpu_custom_call.1} parent=1 // pred_check
      _
    $region23: #{tpu_custom_call.1} parent=1 // pred_check_branch
      %54 = sbr.rel (0) target = $region25
    $region24: #{tpu_custom_call.1} parent=1 // pred_region
      _
    $region25: #{tpu_custom_call.1} parent=1 // pred_fallthru
      _
    // Predicated region
    $region26: #{tpu_custom_call.1} parent=1 // pred_check
      _
    $region27: #{tpu_custom_call.1} parent=1 // pred_check_branch
      %56 = sbr.rel (0) target = $region29
    $region28: #{tpu_custom_call.1} parent=1 // pred_region
      %58 = vsyncadd [#allocation6], 0
      %s59 = sshll.u32 %s6, 4
      %s60 = int_to_ptr.hbm [resolvable:$true] %s59
      %s61 = sshll.u32 [#allocation7], 4
      %s62 = int_to_ptr.vmem [resolvable:$true] %s61
      %67 = dma.hbm_to_vmem [thread:$0]  %s60, 512, %s62, [#allocation6], 128, 128, 8
    $region29: #{tpu_custom_call.1} parent=1 // pred_fallthru
      _
    // Predicated region
    $region30: #{tpu_custom_call.1} parent=1 // pred_check
      _
    $region31: #{tpu_custom_call.1} parent=1 // pred_check_branch
      %69 = sbr.rel (0) target = $region33
    $region32: #{tpu_custom_call.1} parent=1 // pred_region
      _
    $region33: #{tpu_custom_call.1} parent=1 // pred_fallthru
      _
    // Predicated region
    $region34: #{tpu_custom_call.1} parent=1 // pred_check
      _
    $region35: #{tpu_custom_call.1} parent=1 // pred_check_branch
      %71 = sbr.rel (0) target = $region37
    $region36: #{tpu_custom_call.1} parent=1 // pred_region
      _
    $region37: #{tpu_custom_call.1} parent=1 // pred_fallthru
      _
    // Predicated region
    $region38: #{tpu_custom_call.1} parent=1 // pred_check
      _
    $region39: #{tpu_custom_call.1} parent=1 // pred_check_branch
      %73 = sbr.rel (0) target = $region41
    $region40: #{tpu_custom_call.1} parent=1 // pred_region
      %75 = vsyncadd [#allocation9], 0
      %s76 = sshll.u32 %s9, 4
      %s77 = int_to_ptr.hbm [resolvable:$true] %s76
      %s78 = sshll.u32 [#allocation8], 4
      %s79 = int_to_ptr.vmem [resolvable:$true] %s78
      %84 = dma.hbm_to_vmem [thread:$0]  %s77, 512, %s79, [#allocation9], 128, 128, 8
    $region41: #{tpu_custom_call.1} parent=1 // pred_fallthru
      _
    // Predicated region
    $region42: #{tpu_custom_call.1} parent=1 // pred_check
      _
    $region43: #{tpu_custom_call.1} parent=1 // pred_check_branch
      %86 = sbr.rel (0) target = $region45
    $region44: #{tpu_custom_call.1} parent=1 // pred_region
      _
    $region45: #{tpu_custom_call.1} parent=1 // pred_fallthru
      _
    // Predicated region
    $region46: #{tpu_custom_call.1} parent=1 // pred_check
      _
    $region47: #{tpu_custom_call.1} parent=1 // pred_check_branch
      %88 = sbr.rel (0) target = $region49
    $region48: #{tpu_custom_call.1} parent=1 // pred_region
      _
    $region49: #{tpu_custom_call.1} parent=1 // pred_fallthru
      _
    // Predicated region
    $region50: #{tpu_custom_call.1} parent=1 // pred_check
      _
    $region51: #{tpu_custom_call.1} parent=1 // pred_check_branch
      %90 = sbr.rel (0) target = $region53
    $region52: #{tpu_custom_call.1} parent=1 // pred_region
      %92 = dma.done [#allocation3], 128
    $region53: #{tpu_custom_call.1} parent=1 // pred_fallthru
      _
    // Predicated region
    $region54: #{tpu_custom_call.1} parent=1 // pred_check
      _
    $region55: #{tpu_custom_call.1} parent=1 // pred_check_branch
      %94 = sbr.rel (0) target = $region57
    $region56: #{tpu_custom_call.1} parent=1 // pred_region
      %96 = dma.done [#allocation6], 256
    $region57: #{tpu_custom_call.1} parent=1 // pred_fallthru
      _
    // Predicated region
    $region58: #{tpu_custom_call.1} parent=1 // pred_check
      _
    $region59: #{tpu_custom_call.1} parent=1 // pred_check_branch
      %98 = sbr.rel (0) target = $region61
    $region60: #{tpu_custom_call.1} parent=1 // pred_region
      %100 = dma.done [#allocation6], 512
    $region61: #{tpu_custom_call.1} parent=1 // pred_fallthru
      _
    // Predicated region
    $region62: #{tpu_custom_call.1} parent=1 // pred_check
      _
    $region63: #{tpu_custom_call.1} parent=1 // pred_check_branch
      %102 = sbr.rel (0) target = $region65
    $region64: #{tpu_custom_call.1} parent=1 // pred_region
      %104 = dma.done [#allocation9], 512
    $region65: #{tpu_custom_call.1} parent=1 // pred_fallthru
      _
    %v106 = vld [vmem:[#allocation2] sm:$0xf]
    %v107 = vld [vmem:[#allocation2 + $0x4] sm:$0xf]
    %v108 = vld [vmem:[%s1] sm:$0xff]
    %v109 = vld [vmem:[%s1 + $0x8] sm:$0xff]
    %v110 = vld [vmem:[%s2] sm:$0xff]
    %v111 = vld [vmem:[%s2 + $0x8] sm:$0xff]
    %v112 = vld [vmem:[#allocation5] sm:$0xff]
    %v113 = vld [vmem:[#allocation5 + $0x8] sm:$0xff]
    %v114 = vld [vmem:[%s4] sm:$0x1]
    %v115 = vld [vmem:[%s5] sm:$0x1]
    %v116 = vpack.c.bf16 %v111, %v110
    %v119 = vunpack.c.l.b16 %v112
    %v120 = vunpack.c.h.b16 %v112
    %v121 = vunpack.c.l.b16 %v113
    %v122 = vunpack.c.h.b16 %v113
    %v123 = vpack.c.b16 %v121, %v119
    %v124 = vpack.c.b16 %v122, %v120
    %vm127 = vcmask 130048
    %v129 = vsel %vm127, %v116, 0
    %131 = vmatpush.bf16.msra.mxu0 0
    %132 = vmatpush.bf16.msra.mxu0 0
    %133 = vmatpush.bf16.msra.mxu0 0
    %134 = vmatpush.bf16.msra.mxu0 0
    %135 = vmatpush.bf16.msra.mxu0 0
    %136 = vmatpush.bf16.msra.mxu0 0
    %137 = vmatpush.bf16.msra.mxu0 0
    %138 = vmatpush.bf16.msra.mxu0 %v123
    %139 = vmatmul.bf16.gmra.mxu0 %v129
    %v140 = vpop.f32.mrf.mxu0
    %v141 = vadd.f32 0.0, %v140
    %v142 = vpop.f32.mrf.mxu0
    %v143 = vadd.f32 0.0, %v142
    %144 = vdwg.mxu0
    %145 = vmatpush.bf16.msra.mxu0 0
    %146 = vmatpush.bf16.msra.mxu0 0
    %147 = vmatpush.bf16.msra.mxu0 0
    %148 = vmatpush.bf16.msra.mxu0 0
    %149 = vmatpush.bf16.msra.mxu0 0
    %150 = vmatpush.bf16.msra.mxu0 0
    %151 = vmatpush.bf16.msra.mxu0 0
    %152 = vmatpush.bf16.msra.mxu0 %v124
    %153 = vmatmul.bf16.gmra.mxu0 %v129
    %v154 = vpop.f32.mrf.mxu0
    %v155 = vadd.f32 0.0, %v154
    %v156 = vpop.f32.mrf.mxu0
    %v157 = vadd.f32 0.0, %v156
    %158 = vdwg.mxu0
    %v159 = vpack.c.bf16 %v143, %v141
    %v162 = vunpack.c.l.b16 %v106
    %v163 = vunpack.c.l.b16 %v107
    %v164 = vpack.c.b16 %v163, %v162
    %v166 = vsel %vm127, %v164, 0
    %168 = vmatpush.bf16.msra.mxu0 0
    %169 = vmatpush.bf16.msra.mxu0 0
    %170 = vmatpush.bf16.msra.mxu0 0
    %171 = vmatpush.bf16.msra.mxu0 0
    %172 = vmatpush.bf16.msra.mxu0 0
    %173 = vmatpush.bf16.msra.mxu0 0
    %174 = vmatpush.bf16.msra.mxu0 0
    %175 = vmatpush.bf16.msra.mxu0 %v159
    %176 = vmatmul.bf16.gmra.mxu0 %v166
    %v177 = vpop.f32.mrf.mxu0
    %v178 = vadd.f32 0.0, %v177
    %v179 = vpop.f32.mrf.mxu0
    %v180 = vadd.f32 0.0, %v179
    %181 = vdwg.mxu0
    %183 = vset.pattern.permute.xlu0 0
    %184 = vperm.xlu0 %183, %v108
    %v185 = vpop.permute.xlu0 %184
    %188 = vset.pattern.permute.xlu0 0
    %189 = vperm.xlu0 %188, %v109
    %v190 = vpop.permute.xlu0 %189
    %v192 = vmul.f32 %v178, %v185
    %v193 = vmul.f32 %v180, %v190
    %v194 = vadd.f32 %v192, %v155
    %v195 = vadd.f32 %v193, %v157
    %v197 = vperm.slane %v114, 0
    %v199 = vmul.f32 %v194, %v197
    %v200 = vmul.f32 %v195, %v197
    %v202 = vperm.slane %v115, 0
    %v204 = vadd.f32 %v199, %v202
    %v205 = vadd.f32 %v200, %v202
    %v206 = vmax.f32 %v204, 0.0
    %v207 = vmax.f32 %v205, 0.0
    %v208 = vld [vmem:[#allocation7] sm:$0xff]
    %v209 = vld [vmem:[#allocation7 + $0x8] sm:$0xff]
    %v210 = vld [vmem:[#allocation7 + $0x10] sm:$0xff]
    %v211 = vld [vmem:[#allocation7 + $0x18] sm:$0xff]
    %v212 = vld [vmem:[%s7] sm:$0x1]
    %v213 = vld [vmem:[%s8] sm:$0x1]
    %v214 = vpack.c.bf16 %v207, %v206
    %v219 = vunpack.c.l.b16 %v208
    %v220 = vunpack.c.h.b16 %v208
    %v221 = vunpack.c.l.b16 %v209
    %v222 = vunpack.c.h.b16 %v209
    %v223 = vunpack.c.l.b16 %v210
    %v224 = vunpack.c.h.b16 %v210
    %v225 = vunpack.c.l.b16 %v211
    %v226 = vunpack.c.h.b16 %v211
    %v227 = vpack.c.b16 %v221, %v219
    %v228 = vpack.c.b16 %v222, %v220
    %v229 = vpack.c.b16 %v225, %v223
    %v230 = vpack.c.b16 %v226, %v224
    %vm235 = vcmask 261120
    %v237 = vsel %vm235, %v214, 0
    %239 = vmatpush.bf16.msra.mxu0 0
    %240 = vmatpush.bf16.msra.mxu0 0
    %241 = vmatpush.bf16.msra.mxu0 0
    %242 = vmatpush.bf16.msra.mxu0 0
    %243 = vmatpush.bf16.msra.mxu0 0
    %244 = vmatpush.bf16.msra.mxu0 0
    %245 = vmatpush.bf16.msra.mxu0 %v229
    %246 = vmatpush.bf16.msra.mxu0 %v227
    %247 = vmatmul.bf16.gmra.mxu0 %v237
    %v248 = vpop.f32.mrf.mxu0
    %v249 = vadd.f32 0.0, %v248
    %v250 = vpop.f32.mrf.mxu0
    %v251 = vadd.f32 0.0, %v250
    %252 = vdwg.mxu0
    %253 = vmatpush.bf16.msra.mxu0 0
    %254 = vmatpush.bf16.msra.mxu0 0
    %255 = vmatpush.bf16.msra.mxu0 0
    %256 = vmatpush.bf16.msra.mxu0 0
    %257 = vmatpush.bf16.msra.mxu0 0
    %258 = vmatpush.bf16.msra.mxu0 0
    %259 = vmatpush.bf16.msra.mxu0 %v230
    %260 = vmatpush.bf16.msra.mxu0 %v228
    %261 = vmatmul.bf16.gmra.mxu0 %v237
    %v262 = vpop.f32.mrf.mxu0
    %v263 = vadd.f32 0.0, %v262
    %v264 = vpop.f32.mrf.mxu0
    %v265 = vadd.f32 0.0, %v264
    %266 = vdwg.mxu0
    %v267 = vpack.c.bf16 %v251, %v249
    %268 = vmatpush.bf16.msra.mxu0 0
    %269 = vmatpush.bf16.msra.mxu0 0
    %270 = vmatpush.bf16.msra.mxu0 0
    %271 = vmatpush.bf16.msra.mxu0 0
    %272 = vmatpush.bf16.msra.mxu0 0
    %273 = vmatpush.bf16.msra.mxu0 0
    %274 = vmatpush.bf16.msra.mxu0 0
    %275 = vmatpush.bf16.msra.mxu0 %v267
    %276 = vmatmul.bf16.gmra.mxu0 %v166
    %v277 = vpop.f32.mrf.mxu0
    %v278 = vadd.f32 0.0, %v277
    %v279 = vpop.f32.mrf.mxu0
    %v280 = vadd.f32 0.0, %v279
    %281 = vdwg.mxu0
    %v282 = vmul.f32 %v278, %v185
    %v283 = vmul.f32 %v280, %v190
    %v284 = vadd.f32 %v282, %v263
    %v285 = vadd.f32 %v283, %v265
    %v287 = vperm.slane %v212, 0
    %v289 = vmul.f32 %v284, %v287
    %v290 = vmul.f32 %v285, %v287
    %v292 = vperm.slane %v213, 0
    %v294 = vadd.f32 %v289, %v292
    %v295 = vadd.f32 %v290, %v292
    %v296 = vmax.f32 %v294, 0.0
    %v297 = vmax.f32 %v295, 0.0
    %v298 = vld [vmem:[#allocation8] sm:$0xff]
    %v299 = vld [vmem:[#allocation8 + $0x8] sm:$0xff]
    %v300 = vld [vmem:[#allocation8 + $0x10] sm:$0xff]
    %v301 = vld [vmem:[#allocation8 + $0x18] sm:$0xff]
    %v302 = vld [vmem:[%s10] sm:$0x1]
    %v303 = vld [vmem:[%s11] sm:$0x1]
    %v304 = vpack.c.bf16 %v297, %v296
    %v309 = vunpack.c.l.b16 %v298
    %v310 = vunpack.c.h.b16 %v298
    %v311 = vunpack.c.l.b16 %v299
    %v312 = vunpack.c.h.b16 %v299
    %v313 = vunpack.c.l.b16 %v300
    %v314 = vunpack.c.h.b16 %v300
    %v315 = vunpack.c.l.b16 %v301
    %v316 = vunpack.c.h.b16 %v301
    %v317 = vpack.c.b16 %v311, %v309
    %v318 = vpack.c.b16 %v312, %v310
    %v319 = vpack.c.b16 %v315, %v313
    %v320 = vpack.c.b16 %v316, %v314
    %v326 = vsel %vm235, %v304, 0
    %328 = vmatpush.bf16.msra.mxu0 0
    %329 = vmatpush.bf16.msra.mxu0 0
    %330 = vmatpush.bf16.msra.mxu0 0
    %331 = vmatpush.bf16.msra.mxu0 0
    %332 = vmatpush.bf16.msra.mxu0 0
    %333 = vmatpush.bf16.msra.mxu0 0
    %334 = vmatpush.bf16.msra.mxu0 %v319
    %335 = vmatpush.bf16.msra.mxu0 %v317
    %336 = vmatmul.bf16.gmra.mxu0 %v326
    %v337 = vpop.f32.mrf.mxu0
    %v338 = vadd.f32 0.0, %v337
    %v339 = vpop.f32.mrf.mxu0
    %v340 = vadd.f32 0.0, %v339
    %341 = vdwg.mxu0
    %342 = vmatpush.bf16.msra.mxu0 0
    %343 = vmatpush.bf16.msra.mxu0 0
    %344 = vmatpush.bf16.msra.mxu0 0
    %345 = vmatpush.bf16.msra.mxu0 0
    %346 = vmatpush.bf16.msra.mxu0 0
    %347 = vmatpush.bf16.msra.mxu0 0
    %348 = vmatpush.bf16.msra.mxu0 %v320
    %349 = vmatpush.bf16.msra.mxu0 %v318
    %350 = vmatmul.bf16.gmra.mxu0 %v326
    %v351 = vpop.f32.mrf.mxu0
    %v352 = vadd.f32 0.0, %v351
    %v353 = vpop.f32.mrf.mxu0
    %v354 = vadd.f32 0.0, %v353
    %355 = vdwg.mxu0
    %v356 = vpack.c.bf16 %v340, %v338
    %357 = vmatpush.bf16.msra.mxu0 0
    %358 = vmatpush.bf16.msra.mxu0 0
    %359 = vmatpush.bf16.msra.mxu0 0
    %360 = vmatpush.bf16.msra.mxu0 0
    %361 = vmatpush.bf16.msra.mxu0 0
    %362 = vmatpush.bf16.msra.mxu0 0
    %363 = vmatpush.bf16.msra.mxu0 0
    %364 = vmatpush.bf16.msra.mxu0 %v356
    %365 = vmatmul.bf16.gmra.mxu0 %v166
    %v366 = vpop.f32.mrf.mxu0
    %v367 = vadd.f32 0.0, %v366
    %v368 = vpop.f32.mrf.mxu0
    %v369 = vadd.f32 0.0, %v368
    %370 = vdwg.mxu0
    %v371 = vmul.f32 %v367, %v185
    %v372 = vmul.f32 %v369, %v190
    %v373 = vadd.f32 %v371, %v352
    %v374 = vadd.f32 %v372, %v354
    %v376 = vperm.slane %v302, 0
    %v378 = vmul.f32 %v373, %v376
    %v379 = vmul.f32 %v374, %v376
    %v381 = vperm.slane %v303, 0
    %v383 = vadd.f32 %v378, %v381
    %v384 = vadd.f32 %v379, %v381
    %v385 = vlaneseq
    %v386 = vand.u32 %v385, 127
    %vm387 = vcmp.lt.s32.totalorder %v386, 8
    %v388 = vsel %vm387, %v383, -1e+30
    %v389 = vsel %vm387, %v384, -1e+30
    %390 = vmax.xlane.f32.xlu0 %v388
    %v391 = vpop.xlane.xlu0 %390
    %392 = vmax.xlane.f32.xlu0 %v389
    %v393 = vpop.xlane.xlu0 %392
    %v394 = vsub.f32 %v388, %v391
    %v395 = vsub.f32 %v389, %v393
    %v396 = vmul.f32 %v394, 1.442695
    %v397 = vpow.pop %v396
    %v398 = vmul.f32 %v395, 1.442695
    %v399 = vpow.pop %v398
    %v400 = vsel %vm387, %v397, 0.0
    %v401 = vsel %vm387, %v399, 0.0
    %402 = vadd.xlane.f32.xlu0 %v400
    %v403 = vpop.xlane.xlu0 %402
    %404 = vadd.xlane.f32.xlu0 %v401
    %v405 = vpop.xlane.xlu0 %404
    %v406 = vlog2.pop %v403
    %v407 = vmul.f32 %v406, 0.6931472
    %v408 = vlog2.pop %v405
    %v409 = vmul.f32 %v408, 0.6931472
    %v410 = vsub.f32 %v394, %v407
    %v411 = vsub.f32 %v395, %v409
    %v412 = vsel %vm387, %v410, 0.0
    %v413 = vsel %vm387, %v411, 0.0
    %414 = vst [vmem:[#allocation10] sm:$0xff] %v412
    %415 = vst [vmem:[#allocation10 + $0x8] sm:$0xff] %v413
    // Predicated region
    $region66: #{tpu_custom_call.1} parent=1 // pred_check
      _
    $region67: #{tpu_custom_call.1} parent=1 // pred_check_branch
      %417 = sbr.rel (0) target = $region69
    $region68: #{tpu_custom_call.1} parent=1 // pred_region
      %419 = vsyncadd [#allocation4], 0
      %s420 = sshll.u32 [#allocation10], 4
      %s421 = int_to_ptr.vmem [resolvable:$true] %s420
      %s422 = sshll.u32 %s12, 4
      %s423 = int_to_ptr.hbm [resolvable:$true] %s422
      %428 = dma.vmem_to_hbm [thread:$0]  %s421, 256, %s423, [#allocation4], 128, 128, 8
    $region69: #{tpu_custom_call.1} parent=1 // pred_fallthru
      _
    // Predicated region
    $region70: #{tpu_custom_call.1} parent=1 // pred_check
      _
    $region71: #{tpu_custom_call.1} parent=1 // pred_check_branch
      %430 = sbr.rel (0) target = $region73
    $region72: #{tpu_custom_call.1} parent=1 // pred_region
      %432 = dma.done [#allocation4], 256
    $region73: #{tpu_custom_call.1} parent=1 // pred_fallthru
      _
    %433 = vsyncpa [#allocation3], 1
    %434 = vsyncpa [#allocation6], 1
    %435 = vsyncpa [#allocation9], 1
    %436 = vsyncpa [#allocation4], 1

</llo_original>
